<compile_context>
chip_gen: v7x
topology: tpu7x:2x2x1
jax: 0.10.0
libtpu: 0.0.40
codegen_flags: <defaults>
</compile_context>

<pallas_src>
import jax
import jax.numpy as jnp
from jax import lax
from jax.experimental import pallas as pl
from jax.experimental.pallas import tpu as pltpu

_INV_SQRT_2 = 0.7071067811865476      # 1/sqrt(2), precomputed (mul, not div)
_SMALL_BYTES = 256 * 1024             # below this, fused XLA gelu wins
_TARGET_BLOCK_BYTES = 8 * 1024 * 1024 # past the measured HBM-roofline knee
_MIN_GRID_STEPS = 8                   # >= 4 steps per TC on v7x megacore


def _gelu_kernel(x_ref, o_ref):
    # exact GELU: 0.5 * x * (1 + erf(x / sqrt(2)))  (torch default)
    # f32 compute is required on v5e (no bf16 VALU/EUP) and keeps exact-torch
    # numerics everywhere; the kernel stays HBM-bound on v5e/v6e regardless.
    xf = x_ref[...].astype(jnp.float32)
    y = 0.5 * xf * (1.0 + lax.erf(xf * _INV_SQRT_2))
    o_ref[...] = y.astype(o_ref.dtype)


def _round_up(n, m):
    return ((n + m - 1) // m) * m


def gelu_pallas(x):
    """Elementwise exact GELU via a Pallas TPU kernel. Accepts any shape/dtype."""
    orig_shape, orig_dtype = x.shape, x.dtype
    total = int(x.size)
    if total == 0:
        return x
    itemsize = jnp.dtype(orig_dtype).itemsize

    # Small tensors / ragged totals (not a multiple of 128 elements): a fused
    # XLA elementwise op is a single HBM pass; a pallas_call plus any
    # pad/slice/concat around it would only add launch overhead / HBM passes.
    if total * itemsize < _SMALL_BYTES or total % 128 != 0:
        return jax.nn.gelu(x, approximate=False)

    # Largest lane-dense width that divides the element count exactly, so the
    # flatten+reshape is a pure relabeling of contiguous data (no pad, no
    # slice, no extra HBM pass) and every block is a contiguous HBM chunk.
    lanes = next(l for l in (1024, 512, 256, 128) if total % l == 0)
    rows = total // lanes

    # dtype-dependent sublane granularity for the second-minor block dim.
    sublane = {4: 8, 2: 16, 1: 32}.get(itemsize, 8)

    try:
        vmem_cap = int(pltpu.get_tpu_info().vmem_capacity_bytes)
    except Exception:
        vmem_cap = 64 * 1024 * 1024   # conservative (v7x-sized) fallback

    # Input and output blocks are each double-buffered -> ~4x block in flight.
    target_block_bytes = min(_TARGET_BLOCK_BYTES, vmem_cap // 8)
    row_bytes = lanes * itemsize
    tile_rows_cap = max(sublane,
                        (target_block_bytes // row_bytes) // sublane * sublane)

    # Guarantee >= _MIN_GRID_STEPS grid steps (megacore sharding + DMA
    # overlap); per-step overhead (~0.35us) is negligible at these sizes.
    # The final partial row-block (rows % tile_rows) is masked by Pallas.
    tile_rows = min(tile_rows_cap,
                    _round_up(pl.cdiv(rows, _MIN_GRID_STEPS), sublane))
    tile_rows = max(sublane, tile_rows)
    grid = (pl.cdiv(rows, tile_rows),)

    block_bytes = tile_rows * row_bytes
    # 2x in + 2x out buffers + headroom; never above physical VMEM.
    vmem_limit = min(vmem_cap, max(32 * 1024 * 1024,
                                   4 * block_bytes + 8 * 1024 * 1024))

    x2d = x.reshape(rows, lanes)
    out2d = pl.pallas_call(
        _gelu_kernel,
        out_shape=jax.ShapeDtypeStruct((rows, lanes), orig_dtype),
        grid_spec=pltpu.PrefetchScalarGridSpec(
            num_scalar_prefetch=0,
            grid=grid,
            in_specs=[pl.BlockSpec((tile_rows, lanes), lambda i: (i, 0))],
            out_specs=pl.BlockSpec((tile_rows, lanes), lambda i: (i, 0)),
        ),
        compiler_params=pltpu.CompilerParams(
            dimension_semantics=("parallel",),
            vmem_limit_bytes=vmem_limit,
        ),
    )(x2d)
    return out2d.reshape(orig_shape)


if __name__ == "__main__":
    key = jax.random.PRNGKey(0)
    k0, k1, k2, k3, k4 = jax.random.split(key, 5)

    # 1) Module-consistent tiny NCHW activation (takes the fused-XLA fallback).
    x = jax.random.normal(k0, (2, 4, 16, 16), dtype=jnp.float32)
    y = gelu_pallas(x)
    jax.block_until_ready(y)
    y_ref = jax.nn.gelu(x, approximate=False)
    assert y.shape == x.shape and y.dtype == x.dtype
    assert jnp.max(jnp.abs(y - y_ref)) < 1e-5

    # 2) f32 activation large enough to take the Pallas path (evenly tiled).
    x1 = jax.random.normal(k1, (2, 8, 64, 64), dtype=jnp.float32)   # 256 KiB
    y1 = gelu_pallas(x1)
    jax.block_until_ready(y1)
    assert jnp.max(jnp.abs(y1 - jax.nn.gelu(x1, approximate=False))) < 1e-5

    # 3) Pallas path with a ragged final row-block (rows % tile_rows != 0).
    x2 = jax.random.normal(k2, (72, 1024), dtype=jnp.float32)       # 288 KiB
    y2 = gelu_pallas(x2)
    jax.block_until_ready(y2)
    assert jnp.max(jnp.abs(y2 - jax.nn.gelu(x2, approximate=False))) < 1e-5

    # 4) bf16 Pallas path (exercises the 16-row sublane granularity).
    x3 = jax.random.normal(k3, (2, 16, 64, 64), dtype=jnp.bfloat16)
    y3 = gelu_pallas(x3)
    jax.block_until_ready(y3)
    ref3 = jax.nn.gelu(x3.astype(jnp.float32), approximate=False).astype(jnp.bfloat16)
    assert y3.shape == x3.shape and y3.dtype == x3.dtype
    assert jnp.max(jnp.abs(y3.astype(jnp.float32) - ref3.astype(jnp.float32))) < 2e-2

    # 5) Awkward (non-128-divisible) shape -> fallback path, still exact.
    x4 = jax.random.normal(k4, (3, 5, 7), dtype=jnp.float32)
    y4 = gelu_pallas(x4)
    jax.block_until_ready(y4)
    assert jnp.max(jnp.abs(y4 - jax.nn.gelu(x4, approximate=False))) < 1e-5

    print("KERNEL_OK")
</pallas_src>

<mosaic_0001>
module attributes {stable_mosaic.version = 11 : i64} {
  func.func @_gelu_kernel(%arg0: i32, %arg1: memref<8x1024xf32, #tpu.memory_space<vmem>>, %arg2: memref<8x1024xf32, #tpu.memory_space<vmem>>) attributes {dimension_semantics = [#tpu.dimension_semantics<parallel>], iteration_bounds = array<i64: 8>, scalar_prefetch = 0 : i64, scratch_operands = 0 : i64, tpu.core_type = #tpu.core_type<tc>, window_params = [{transform_indices = @transform_0, window_bounds = array<i64: 8, 1024>}, {transform_indices = @transform_1, window_bounds = array<i64: 8, 1024>}]} {
    %c0 = arith.constant 0 : index
    %c0_0 = arith.constant 0 : index
    %0 = vector.load %arg1[%c0, %c0_0] : memref<8x1024xf32, #tpu.memory_space<vmem>>, vector<8x1024xf32>
    %cst = arith.constant 5.000000e-01 : f32
    %1 = vector.broadcast %cst : f32 to vector<8x1024xf32>
    %2 = arith.mulf %1, %0 : vector<8x1024xf32>
    %cst_1 = arith.constant 0.707106769 : f32
    %3 = vector.broadcast %cst_1 : f32 to vector<8x1024xf32>
    %4 = arith.mulf %0, %3 : vector<8x1024xf32>
    %5 = math.erf %4 : vector<8x1024xf32>
    %cst_2 = arith.constant 1.000000e+00 : f32
    %6 = vector.broadcast %cst_2 : f32 to vector<8x1024xf32>
    %7 = arith.addf %6, %5 : vector<8x1024xf32>
    %8 = arith.mulf %2, %7 : vector<8x1024xf32>
    %c0_3 = arith.constant 0 : index
    %c0_4 = arith.constant 0 : index
    %9 = vector.load %arg2[%c0_3, %c0_4] : memref<8x1024xf32, #tpu.memory_space<vmem>>, vector<8x1024xf32>
    tpu.vector_store %arg2[%c0_3, %c0_4], %8 {strides = array<i32>} : memref<8x1024xf32, #tpu.memory_space<vmem>>, vector<8x1024xf32>,
    return
  }
  func.func @transform_0(%arg0: i32) -> (i32, i32) {
    %c0_i32 = arith.constant 0 : i32
    %c0_i32_0 = arith.constant 0 : i32
    return %arg0, %c0_i32 : i32, i32
  }
  func.func @transform_1(%arg0: i32) -> (i32, i32) {
    %c0_i32 = arith.constant 0 : i32
    %c0_i32_0 = arith.constant 0 : i32
    return %arg0, %c0_i32 : i32, i32
  }
}

</mosaic_0001>

<llo_original>
// kernel: tpu_custom_call.1
$region0: #{tpu_custom_call.1}
  #allocation0 [shape = 'u32[]', space=smem, size = 0x4, offset = 0x4, fixed_abs, tag = 'smem constant byte address 0x4 - core index']
  #allocation1 [shape = 'u32[144,128]{1,0:T(1,128)}', space=vmem, size = 0x12000, scoped, tag = 'internal scratch']
  %s0 = inlined_call_operand.hbm [shape: f32[64,1024], index: 0, kind: input, shape index: {}]
  %s1 = inlined_call_operand.hbm [shape: f32[64,1024], index: 1, kind: output, shape index: {}]
  %s2 = sld [smem:[#allocation0]]
  $region41: #{tpu_custom_call.1} parent=0
    _
  %s4 = ssub.s32 1, %s2
  %s5 = scalar_select 0, %s4, %s2
  $region1: #{tpu_custom_call.1} parent=0
    #allocation2 [shape = 'u8[65536]{0}', space=vmem, size = 0x10000, scoped, tag = 'input window, operand 0']
    #allocation3 [shape = 's32[2]{0}', space=sflag, size = 0x8, scoped, tag = 'scoped memory for tpu_custom_call.1']
    #allocation4 [shape = 's32[2]{0}', space=sflag, size = 0x8, scoped, tag = 'scoped memory for tpu_custom_call.1']
    #allocation5 [shape = 'u8[65536]{0}', space=vmem, size = 0x10000, scoped, tag = 'output window, operand 0']
    %6 = vsyncpa [#allocation3], 0
    %s7 = scalar_lea.sflag [#allocation3], 1
    %8 = vsyncpa %s7, 0
    %9 = vsyncpa [#allocation4], 0
    %s10 = scalar_lea.sflag [#allocation4], 1
    %11 = vsyncpa %s10, 0
    loop: start=0, step=1, limit=10
    $region2: #{tpu_custom_call.1} parent=1 // loop_pre_header
      _
    $region3: #{tpu_custom_call.1} parent=1 // loop_header
      %s13 = sphi 0, %s17
      %p14 = scmp.ge.s32.totalorder %s13, 10
      %s23 = sphi 0, %s25
      %s26 = sphi 0, %s23
      %s27 = sphi 0, %s26
      %s43 = sphi 0, %s27
      %s49 = sphi 0, %s51
      %s52 = sphi 0, %s49
      %s53 = sphi 0, %s52
      %s69 = sphi 0, %s53
    $region4: #{tpu_custom_call.1} parent=1 // loop_header_branch
      %16 = sbr.rel (%p14) target = $region8
    $region5: #{tpu_custom_call.1} parent=1 // loop_body
      %s18 = ssub.s32 %s13, 1
      %s19 = ssub.s32 %s13, 2
      %s20 = sadd.s32 %s13, 1
      %s21 = ssub.s32 %s13, %s20
      %p22 = scmp.eq.s32.totalorder %s21, 0
      %s24 = sadd.s32 %s23, 1
      %s25 = scalar_select %p22, %s23, %s24
      %p28 = pneg %p22
      %p29 = scmp.eq.s32.totalorder %s13, 7
      %p30 = por %p28, %p29
      %p31 = scmp.ne.s32.totalorder %s23, %s26
      %p32 = scmp.eq.s32.totalorder %s13, 0
      %p33 = por %p31, %p32
      %p34 = scmp.ne.s32.totalorder %s23, %s26
      %p35 = scmp.eq.s32.totalorder %s18, 7
      %p36 = por %p34, %p35
      %p37 = scmp.ne.s32.totalorder %s26, %s27
      %p38 = scmp.eq.s32.totalorder %s18, 0
      %p39 = por %p37, %p38
      %p40 = scmp.ne.s32.totalorder %s26, %s27
      %p41 = scmp.eq.s32.totalorder %s19, 7
      %p42 = por %p40, %p41
      %p44 = scmp.ne.s32.totalorder %s27, %s43
      %p45 = scmp.eq.s32.totalorder %s19, 0
      %p46 = por %p44, %p45
      %s47 = ssub.s32 %s13, %s20
      %p48 = scmp.eq.s32.totalorder %s47, 0
      %s50 = sadd.s32 %s49, 1
      %s51 = scalar_select %p48, %s49, %s50
      %p54 = pneg %p48
      %p55 = scmp.eq.s32.totalorder %s13, 7
      %p56 = por %p54, %p55
      %p57 = scmp.ne.s32.totalorder %s49, %s52
      %p58 = scmp.eq.s32.totalorder %s13, 0
      %p59 = por %p57, %p58
      %p60 = scmp.ne.s32.totalorder %s49, %s52
      %p61 = scmp.eq.s32.totalorder %s18, 7
      %p62 = por %p60, %p61
      %p63 = scmp.ne.s32.totalorder %s52, %s53
      %p64 = scmp.eq.s32.totalorder %s18, 0
      %p65 = por %p63, %p64
      %p66 = scmp.ne.s32.totalorder %s52, %s53
      %p67 = scmp.eq.s32.totalorder %s19, 7
      %p68 = por %p66, %p67
      %p70 = scmp.ne.s32.totalorder %s53, %s69
      %p71 = scmp.eq.s32.totalorder %s19, 0
      %p72 = por %p70, %p71
      %p73 = scmp.le.s32.totalorder 1, %s13
      %p74 = scmp.lt.s32.totalorder %s13, 9
      %p75 = pnand %p73, %p74
      %p76 = pneg %p75
      // Predicated region
      $region9: #{tpu_custom_call.1} parent=5 // pred_check
        _
      $region10: #{tpu_custom_call.1} parent=5 // pred_check_branch
        %78 = sbr.rel (%p75) target = $region12
      $region11: #{tpu_custom_call.1} parent=5 // pred_region
        %s79 = ssub.s32 %s13, 1
      $region12: #{tpu_custom_call.1} parent=5 // pred_fallthru
        _
      %p80 = scmp.lt.s32.totalorder %s13, 8
      // Predicated region
      $region13: #{tpu_custom_call.1} parent=5 // pred_check
        %p81 = pneg %p80
      $region14: #{tpu_custom_call.1} parent=5 // pred_check_branch
        %83 = sbr.rel (%p81) target = $region16
      $region15: #{tpu_custom_call.1} parent=5 // pred_region
        // Predicated region
        $region17: #{tpu_custom_call.1} parent=15 // pred_check
          %p84 = pneg %p33
        $region18: #{tpu_custom_call.1} parent=15 // pred_check_branch
          %86 = sbr.rel (%p84) target = $region20
        $region19: #{tpu_custom_call.1} parent=15 // pred_region
          %s87 = sand.u32 %s23, 1
          %s88 = scalar_lea.sflag [#allocation3], %s87
          %s89 = sand.u32 %s23, 1
          %s90 = smul.addr %s89, 64
          %s91 = scalar_lea.vmem [#allocation2], %s90
          %s93 = ssub.s32 1024, 1024
          %94 = vsyncadd %s88, %s93
          %s95 = smul.addr %s13, 8
          %s96 = smul.addr %s95, 128
          %s97 = scalar_lea.hbm %s0, %s96
          %s99 = sshll.u32 %s91, 4
          %s100 = int_to_ptr.vmem [resolvable:$true] %s99
          %102 = dma.hbm_to_vmem [thread:$0]  %s97, 1024, %s100, %s88
        $region20: #{tpu_custom_call.1} parent=15 // pred_fallthru
          _
      $region16: #{tpu_custom_call.1} parent=5 // pred_fallthru
        _
      %p103 = scmp.le.s32.totalorder 1, %s13
      %p104 = scmp.lt.s32.totalorder %s13, 9
      %p105 = pnand %p103, %p104
      %p106 = pneg %p105
      // Predicated region
      $region21: #{tpu_custom_call.1} parent=5 // pred_check
        _
      $region22: #{tpu_custom_call.1} parent=5 // pred_check_branch
        %108 = sbr.rel (%p105) target = $region24
      $region23: #{tpu_custom_call.1} parent=5 // pred_region
        %s109 = ssub.s32 %s13, 1
        %s110 = sand.u32 %s26, 1
        %s111 = scalar_lea.sflag [#allocation3], %s110
        %s112 = sand.u32 %s26, 1
        %s113 = smul.addr %s112, 64
        %s114 = scalar_lea.vmem [#allocation2], %s113
        // Predicated region
        $region25: #{tpu_custom_call.1} parent=23 // pred_check
          %p115 = pneg %p39
        $region26: #{tpu_custom_call.1} parent=23 // pred_check_branch
          %117 = sbr.rel (%p115) target = $region28
        $region27: #{tpu_custom_call.1} parent=23 // pred_region
          %118 = dma.done %s111, 1024
        $region28: #{tpu_custom_call.1} parent=23 // pred_fallthru
          _
        %s119 = sand.u32 %s26, 1
        %s120 = scalar_lea.sflag [#allocation3], %s119
        %s121 = sand.u32 %s26, 1
        %s122 = smul.addr %s121, 64
        %s123 = scalar_lea.vmem [#allocation2], %s122
        %p124 = pneg %p39
        %p125 = pneg %p36
        %p126 = pneg %p65
        %p127 = pneg %p62
        %s128 = sand.u32 %s52, 1
        %s129 = scalar_lea.sflag [#allocation4], %s128
        %s130 = sand.u32 %s52, 1
        %s131 = smul.addr %s130, 64
        %s132 = scalar_lea.vmem [#allocation5], %s131
        %v133 = vld [vmem:[%s114] sm:$0xff]
        %v134 = vld [vmem:[%s114 + $0x8] sm:$0xff]
        %v135 = vld [vmem:[%s114 + $0x10] sm:$0xff]
        %v136 = vld [vmem:[%s114 + $0x18] sm:$0xff]
        %v137 = vld [vmem:[%s114 + $0x20] sm:$0xff]
        %v138 = vld [vmem:[%s114 + $0x28] sm:$0xff]
        %v139 = vld [vmem:[%s114 + $0x30] sm:$0xff]
        %v140 = vld [vmem:[%s114 + $0x38] sm:$0xff]
        %v141 = vmul.f32 %v133, 0.5
        %v142 = vmul.f32 %v134, 0.5
        %v143 = vmul.f32 %v135, 0.5
        %v144 = vmul.f32 %v136, 0.5
        %v145 = vmul.f32 %v137, 0.5
        %v146 = vmul.f32 %v138, 0.5
        %v147 = vmul.f32 %v139, 0.5
        %v148 = vmul.f32 %v140, 0.5
        %v149 = vmul.f32 %v133, 0.70710677
        %v150 = vmul.f32 %v134, 0.70710677
        %v151 = vmul.f32 %v135, 0.70710677
        %v152 = vmul.f32 %v136, 0.70710677
        %v153 = vmul.f32 %v137, 0.70710677
        %v154 = vmul.f32 %v138, 0.70710677
        %v155 = vmul.f32 %v139, 0.70710677
        %v156 = vmul.f32 %v140, 0.70710677
        %v157 = verf.f32.pop %v149
        %v158 = verf.f32.pop %v150
        %v159 = verf.f32.pop %v151
        %v160 = verf.f32.pop %v152
        %v161 = verf.f32.pop %v153
        %v162 = verf.f32.pop %v154
        %v163 = verf.f32.pop %v155
        %v164 = verf.f32.pop %v156
        %v165 = vadd.f32 %v157, 1.0
        %v166 = vadd.f32 %v158, 1.0
        %v167 = vadd.f32 %v159, 1.0
        %v168 = vadd.f32 %v160, 1.0
        %v169 = vadd.f32 %v161, 1.0
        %v170 = vadd.f32 %v162, 1.0
        %v171 = vadd.f32 %v163, 1.0
        %v172 = vadd.f32 %v164, 1.0
        %v173 = vmul.f32 %v141, %v165
        %v174 = vmul.f32 %v142, %v166
        %v175 = vmul.f32 %v143, %v167
        %v176 = vmul.f32 %v144, %v168
        %v177 = vmul.f32 %v145, %v169
        %v178 = vmul.f32 %v146, %v170
        %v179 = vmul.f32 %v147, %v171
        %v180 = vmul.f32 %v148, %v172
        %181 = vst [vmem:[%s132] sm:$0xff] %v173
        %182 = vst [vmem:[%s132 + $0x8] sm:$0xff] %v174
        %183 = vst [vmem:[%s132 + $0x10] sm:$0xff] %v175
        %184 = vst [vmem:[%s132 + $0x18] sm:$0xff] %v176
        %185 = vst [vmem:[%s132 + $0x20] sm:$0xff] %v177
        %186 = vst [vmem:[%s132 + $0x28] sm:$0xff] %v178
        %187 = vst [vmem:[%s132 + $0x30] sm:$0xff] %v179
        %188 = vst [vmem:[%s132 + $0x38] sm:$0xff] %v180
        %s189 = sand.u32 %s52, 1
        %s190 = scalar_lea.sflag [#allocation4], %s189
        %s191 = sand.u32 %s52, 1
        %s192 = smul.addr %s191, 64
        %s193 = scalar_lea.vmem [#allocation5], %s192
        // Predicated region
        $region29: #{tpu_custom_call.1} parent=23 // pred_check
          %p194 = pneg %p62
        $region30: #{tpu_custom_call.1} parent=23 // pred_check_branch
          %196 = sbr.rel (%p194) target = $region32
        $region31: #{tpu_custom_call.1} parent=23 // pred_region
          %s198 = ssub.s32 1024, 1024
          %199 = vsyncadd %s190, %s198
          %s200 = smul.addr %s18, 8
          %s201 = smul.addr %s200, 128
          %s202 = scalar_lea.hbm %s1, %s201
          %s204 = sshll.u32 %s193, 4
          %s205 = int_to_ptr.vmem [resolvable:$true] %s204
          %207 = dma.vmem_to_hbm [thread:$0]  %s205, 1024, %s202, %s190
        $region32: #{tpu_custom_call.1} parent=23 // pred_fallthru
          _
      $region24: #{tpu_custom_call.1} parent=5 // pred_fallthru
        _
      %p208 = scmp.le.s32.totalorder 2, %s13
      // Predicated region
      $region33: #{tpu_custom_call.1} parent=5 // pred_check
        %p209 = pneg %p208
      $region34: #{tpu_custom_call.1} parent=5 // pred_check_branch
        %211 = sbr.rel (%p209) target = $region36
      $region35: #{tpu_custom_call.1} parent=5 // pred_region
        %s212 = ssub.s32 %s13, 2
        // Predicated region
        $region37: #{tpu_custom_call.1} parent=35 // pred_check
          %p213 = pneg %p68
        $region38: #{tpu_custom_call.1} parent=35 // pred_check_branch
          %215 = sbr.rel (%p213) target = $region40
        $region39: #{tpu_custom_call.1} parent=35 // pred_region
          %s216 = sand.u32 %s53, 1
          %s217 = scalar_lea.sflag [#allocation4], %s216
          %s218 = sand.u32 %s53, 1
          %s219 = smul.addr %s218, 64
          %s220 = scalar_lea.vmem [#allocation5], %s219
          %221 = dma.done %s217, 1024
        $region40: #{tpu_custom_call.1} parent=35 // pred_fallthru
          _
      $region36: #{tpu_custom_call.1} parent=5 // pred_fallthru
        _
    $region6: #{tpu_custom_call.1} parent=1 // loop_footer
      %s17 = sadd.s32 1, %s13
    $region7: #{tpu_custom_call.1} parent=1 // loop_footer_branch
      %12 = sbr.rel target = $region3
    $region8: #{tpu_custom_call.1} parent=1 // loop_exit
      _
    %222 = vsyncpa [#allocation3], 1
    %s223 = scalar_lea.sflag [#allocation3], 1
    %224 = vsyncpa %s223, 1
    %225 = vsyncpa [#allocation4], 1
    %s226 = scalar_lea.sflag [#allocation4], 1
    %227 = vsyncpa %s226, 1

</llo_original>
